<compile_context>
chip_gen: v5e
topology: v5e:2x2
jax: 0.10.0
libtpu: 0.0.40
codegen_flags: <defaults>
</compile_context>

<pallas_src>
import jax
import jax.numpy as jnp
from jax import lax
from jax.experimental import pallas as pl
from jax.experimental.pallas import tpu as pltpu


# -----------------------------------------------------------------------------
# Tile-size helpers
# -----------------------------------------------------------------------------
def _row_tile(M, target=1024):
    """Largest row tile <= target that divides M and is a multiple of 8 (else M)."""
    if M <= target:
        return M
    t = target - (target % 8)
    while t >= 8:
        if M % t == 0:
            return t
        t -= 8
    return M


def _even_h_tile(H, W, target_rows=2048):
    """Largest even divisor TH of H with TH*W <= target_rows and 8-aligned blocks."""
    if H * W <= target_rows:
        return H
    start = H if H % 2 == 0 else H - 1
    for th in range(start, 1, -2):
        if (H % th == 0 and th * W <= target_rows
                and (th * W) % 8 == 0 and ((th // 2) * (W // 2)) % 8 == 0):
            return th
    return H


# -----------------------------------------------------------------------------
# 1x1 convolution (top pyramid level): (N*H*W, Cin) @ (Cin, Cout) + bias, row-tiled
# -----------------------------------------------------------------------------
def _conv1x1_kernel(x_ref, w_ref, b_ref, o_ref):
    acc = jnp.dot(x_ref[...], w_ref[...], preferred_element_type=jnp.float32)
    o_ref[...] = (acc + b_ref[...]).astype(o_ref.dtype)


def conv1x1(x_nhwc, w, b, row_tile_target=1024):
    N, H, W, Cin = x_nhwc.shape
    Cout = w.shape[1]
    M = N * H * W
    tm = _row_tile(M, row_tile_target)
    xf = x_nhwc.reshape(M, Cin)
    out = pl.pallas_call(
        _conv1x1_kernel,
        out_shape=jax.ShapeDtypeStruct((M, Cout), x_nhwc.dtype),
        grid=(M // tm,),
        in_specs=[
            pl.BlockSpec((tm, Cin), lambda i: (i, 0)),
            pl.BlockSpec((Cin, Cout), lambda i: (0, 0)),
            pl.BlockSpec((1, Cout), lambda i: (0, 0)),
        ],
        out_specs=pl.BlockSpec((tm, Cout), lambda i: (i, 0)),
        compiler_params=pltpu.CompilerParams(dimension_semantics=("parallel",)),
    )(xf, w, b.reshape(1, Cout))
    return out.reshape(N, H, W, Cout)


# -----------------------------------------------------------------------------
# Fused lateral 1x1 conv + nearest 2x upsample of F_prev + add
#   out = conv1x1(x) + upsample2x_nearest(F_prev)
# Upsample = BlockSpec index_map picks the matching coarse tile; inside the kernel a
# constant 0/1 expansion matrix E (TM x TMc) replicates each coarse element to its
# 2x2 fine positions via one MXU matmul.
# -----------------------------------------------------------------------------
def _merge_kernel(x_ref, w_ref, b_ref, fp_ref, e_ref, o_ref):
    lat = jnp.dot(x_ref[0], w_ref[...], preferred_element_type=jnp.float32)   # (TM, Cout)
    up = jnp.dot(e_ref[...], fp_ref[0], preferred_element_type=jnp.float32)   # (TM, Cout)
    o_ref[0] = (lat + up + b_ref[...]).astype(o_ref.dtype)


def _expand_matrix(TH, W):
    """0/1 matrix mapping a row-major-flattened (TH/2, W/2) coarse tile to its
    nearest-neighbour 2x upsampled, row-major-flattened (TH, W) tile."""
    Wc = W // 2
    TM, TMc = TH * W, (TH // 2) * Wc
    m = jnp.arange(TM)
    src = ((m // W) // 2) * Wc + (m % W) // 2
    return (src[:, None] == jnp.arange(TMc)[None, :]).astype(jnp.float32)


def conv1x1_merge(x_nhwc, w, b, fprev_nhwc, row_tile_target=2048):
    N, H, W, Cin = x_nhwc.shape
    Cout = w.shape[1]
    Nc, Hc, Wc, Cc = fprev_nhwc.shape
    assert (Nc, Hc * 2, Wc * 2, Cc) == (N, H, W, Cout)
    TH = _even_h_tile(H, W, row_tile_target)          # even row tile (divides H)
    TM, TMc = TH * W, (TH // 2) * Wc
    E = _expand_matrix(TH, W)
    xf = x_nhwc.reshape(N, H * W, Cin)                # free contiguous reshapes
    ff = fprev_nhwc.reshape(N, Hc * Wc, Cout)
    out = pl.pallas_call(
        _merge_kernel,
        out_shape=jax.ShapeDtypeStruct((N, H * W, Cout), x_nhwc.dtype),
        grid=(N, H // TH),
        in_specs=[
            pl.BlockSpec((1, TM, Cin), lambda n, t: (n, t, 0)),
            pl.BlockSpec((Cin, Cout), lambda n, t: (0, 0)),
            pl.BlockSpec((1, Cout), lambda n, t: (0, 0)),
            pl.BlockSpec((1, TMc, Cout), lambda n, t: (n, t, 0)),   # coarse tile
            pl.BlockSpec((TM, TMc), lambda n, t: (0, 0)),           # expansion matrix
        ],
        out_specs=pl.BlockSpec((1, TM, Cout), lambda n, t: (n, t, 0)),
        compiler_params=pltpu.CompilerParams(
            dimension_semantics=("parallel", "parallel")),
    )(xf, w, b.reshape(1, Cout), ff, E)
    return out.reshape(N, H, W, Cout)


# -----------------------------------------------------------------------------
# 3x3 convolution, padding=1, one batch element per grid step.
# Padded input is flattened to ((H+3)*(W+2), Cin); each tap (dh, dw) is the
# contiguous slab starting at row dh*(W+2)+dw of length H*(W+2). 9 slab matmuls
# accumulate into one f32 VMEM scratch; single store. The 2 junk columns per output
# row (from width padding) are sliced off in the wrapper.
# -----------------------------------------------------------------------------
def _make_conv3x3_kernel(H, Wp, Cin, Cout):
    M = H * Wp

    def kernel(xf_ref, w_ref, b_ref, o_ref, acc_ref):
        acc_ref[...] = jnp.zeros_like(acc_ref)
        for dh in range(3):
            for dw in range(3):
                slab = xf_ref[0, pl.ds(dh * Wp + dw, M), :]          # (M, Cin)
                acc_ref[...] += jnp.dot(slab, w_ref[dh * 3 + dw],
                                        preferred_element_type=jnp.float32)
        o_ref[0] = (acc_ref[...] + b_ref[...]).astype(o_ref.dtype)   # one big store

    return kernel


def conv3x3(x_nhwc, w, b):
    N, H, W, Cin = x_nhwc.shape
    Cout = w.shape[-1]
    Wp = W + 2
    # H padded by (1, 2): the extra bottom row only keeps the shifted contiguous
    # slabs in-bounds; it never contributes to a valid output column.
    xp = jnp.pad(x_nhwc, ((0, 0), (1, 2), (1, 1), (0, 0)))
    xf = xp.reshape(N, (H + 3) * Wp, Cin)
    wf = w.reshape(9, Cin, Cout)
    M = H * Wp
    out = pl.pallas_call(
        _make_conv3x3_kernel(H, Wp, Cin, Cout),
        out_shape=jax.ShapeDtypeStruct((N, M, Cout), x_nhwc.dtype),
        grid=(N,),
        in_specs=[
            pl.BlockSpec((1, (H + 3) * Wp, Cin), lambda n: (n, 0, 0)),
            pl.BlockSpec((9, Cin, Cout), lambda n: (0, 0, 0)),
            pl.BlockSpec((1, Cout), lambda n: (0, 0)),
        ],
        out_specs=pl.BlockSpec((1, M, Cout), lambda n: (n, 0, 0)),
        scratch_shapes=[pltpu.VMEM((M, Cout), jnp.float32)],
        compiler_params=pltpu.CompilerParams(dimension_semantics=("parallel",)),
    )(xf, wf, b.reshape(1, Cout))
    return out.reshape(N, H, Wp, Cout)[:, :, :W, :]


# -----------------------------------------------------------------------------
# FPN forward (matches the PyTorch module semantics)
# -----------------------------------------------------------------------------
def fpn_forward(xs_nchw, params):
    w1s, b1s, w2s, b2s = params
    n = len(xs_nchw)
    assert n == len(w1s)
    xs = [jnp.transpose(x, (0, 2, 3, 1)) for x in xs_nchw]   # NCHW -> NHWC
    Bs = [None] * n
    F_prev = conv1x1(xs[-1], w1s[-1], b1s[-1])
    Bs[-1] = conv3x3(F_prev, w2s[-1], b2s[-1])
    for i in range(n - 2, -1, -1):
        # fused: conv1x1 lateral + nearest-2x upsample of F_prev + add
        F_prev = conv1x1_merge(xs[i], w1s[i], b1s[i], F_prev)
        Bs[i] = conv3x3(F_prev, w2s[i], b2s[i])
    return [jnp.transpose(B, (0, 3, 1, 2)) for B in Bs]      # NHWC -> NCHW


# -----------------------------------------------------------------------------
# Deterministic parameter init (shapes follow nn.Conv2d in the module)
# -----------------------------------------------------------------------------
def init_params(key, features_out, features_in):
    w1s, b1s, w2s, b2s = [], [], [], []
    for cin in features_in:
        key, k1, k2, k3, k4 = jax.random.split(key, 5)
        bound1 = 1.0 / (cin ** 0.5)
        w1s.append(jax.random.uniform(k1, (cin, features_out), jnp.float32,
                                      -bound1, bound1))               # (Cin, Cout)
        b1s.append(jax.random.uniform(k2, (features_out,), jnp.float32,
                                      -bound1, bound1))
        bound2 = 1.0 / ((features_out * 9) ** 0.5)
        w2s.append(jax.random.uniform(k3, (3, 3, features_out, features_out),
                                      jnp.float32, -bound2, bound2))   # HWIO
        b2s.append(jax.random.uniform(k4, (features_out,), jnp.float32,
                                      -bound2, bound2))
    return w1s, b1s, w2s, b2s


# -----------------------------------------------------------------------------
# Pure-JAX reference (correctness check only)
# -----------------------------------------------------------------------------
def fpn_reference(xs_nchw, params):
    w1s, b1s, w2s, b2s = params
    xs = [jnp.transpose(x, (0, 2, 3, 1)) for x in xs_nchw]
    dn = ('NHWC', 'HWIO', 'NHWC')

    def c1(x, w, b):
        y = lax.conv_general_dilated(x, w.reshape(1, 1, *w.shape), (1, 1),
                                     'VALID', dimension_numbers=dn)
        return y + b

    def c3(x, w, b):
        y = lax.conv_general_dilated(x, w, (1, 1), 'SAME', dimension_numbers=dn)
        return y + b

    n = len(xs)
    Bs = [None] * n
    Fp = c1(xs[-1], w1s[-1], b1s[-1])
    Bs[-1] = c3(Fp, w2s[-1], b2s[-1])
    for i in range(n - 2, -1, -1):
        F = c1(xs[i], w1s[i], b1s[i])
        Fp = jnp.repeat(jnp.repeat(Fp, 2, axis=1), 2, axis=2) + F
        Bs[i] = c3(Fp, w2s[i], b2s[i])
    return [jnp.transpose(B, (0, 3, 1, 2)) for B in Bs]


if __name__ == "__main__":
    features_in = [8, 16, 32, 64]   # channels of F1..F4 (small synthetic config)
    features_out = 32
    N = 2
    spatials = [16, 8, 4, 2]        # F1 is highest resolution, F4 lowest

    key = jax.random.PRNGKey(0)
    xs_nchw = []
    for c, s in zip(features_in, spatials):
        key, k = jax.random.split(key)
        xs_nchw.append(jax.random.normal(k, (N, c, s, s), jnp.float32))

    params = init_params(jax.random.PRNGKey(42), features_out, features_in)

    outs = fpn_forward(xs_nchw, params)
    outs = [jax.block_until_ready(o) for o in outs]

    refs = fpn_reference(xs_nchw, params)
    for i, (o, r) in enumerate(zip(outs, refs)):
        assert o.shape == (N, features_out, spatials[i], spatials[i]), o.shape
        assert jnp.allclose(o, r, atol=1e-3, rtol=1e-3), f"mismatch at level {i}"

    print("KERNEL_OK")
</pallas_src>

<mosaic_0001>
module attributes {stable_mosaic.version = 11 : i64} {
  func.func @_conv1x1_kernel(%arg0: i32, %arg1: memref<8x64xf32, #tpu.memory_space<vmem>>, %arg2: memref<64x32xf32, #tpu.memory_space<vmem>>, %arg3: memref<1x32xf32, #tpu.memory_space<vmem>>, %arg4: memref<8x32xf32, #tpu.memory_space<vmem>>) attributes {dimension_semantics = [#tpu.dimension_semantics<parallel>], iteration_bounds = array<i64: 1>, scalar_prefetch = 0 : i64, scratch_operands = 0 : i64, tpu.core_type = #tpu.core_type<tc>, window_params = [{transform_indices = @transform_0, window_bounds = array<i64: 8, 64>}, {pipeline_mode = #tpu.pipeline_mode<synchronous>, transform_indices = @transform_1, window_bounds = array<i64: 64, 32>}, {pipeline_mode = #tpu.pipeline_mode<synchronous>, transform_indices = @transform_2, window_bounds = array<i64: 1, 32>}, {transform_indices = @transform_3, window_bounds = array<i64: 8, 32>}]} {
    %c0 = arith.constant 0 : index
    %c0_0 = arith.constant 0 : index
    %0 = vector.load %arg1[%c0, %c0_0] : memref<8x64xf32, #tpu.memory_space<vmem>>, vector<8x64xf32>
    %c0_1 = arith.constant 0 : index
    %c0_2 = arith.constant 0 : index
    %1 = vector.load %arg2[%c0_1, %c0_2] : memref<64x32xf32, #tpu.memory_space<vmem>>, vector<64x32xf32>
    %cst = arith.constant dense<0.000000e+00> : vector<8x32xf32>
    %2 = tpu.matmul %0, %1, %cst {dimension_numbers = #tpu.dot_dimension_numbers<[1], [0], [0], [1], [0, 0, 1, 1], [], []>} : vector<8x64xf32>, vector<64x32xf32>, vector<8x32xf32> -> vector<8x32xf32>
    %c0_3 = arith.constant 0 : index
    %c0_4 = arith.constant 0 : index
    %3 = vector.load %arg3[%c0_3, %c0_4] : memref<1x32xf32, #tpu.memory_space<vmem>>, vector<1x32xf32>
    %4 = vector.broadcast %3 : vector<1x32xf32> to vector<8x32xf32>
    %5 = arith.addf %2, %4 : vector<8x32xf32>
    %c0_5 = arith.constant 0 : index
    %c0_6 = arith.constant 0 : index
    %6 = vector.load %arg4[%c0_5, %c0_6] : memref<8x32xf32, #tpu.memory_space<vmem>>, vector<8x32xf32>
    tpu.vector_store %arg4[%c0_5, %c0_6], %5 {strides = array<i32>} : memref<8x32xf32, #tpu.memory_space<vmem>>, vector<8x32xf32>,
    return
  }
  func.func @transform_0(%arg0: i32) -> (i32, i32) {
    %c0_i32 = arith.constant 0 : i32
    %c0_i32_0 = arith.constant 0 : i32
    return %arg0, %c0_i32 : i32, i32
  }
  func.func @transform_1(%arg0: i32) -> (i32, i32) {
    %c0_i32 = arith.constant 0 : i32
    %c0_i32_0 = arith.constant 0 : i32
    %c0_i32_1 = arith.constant 0 : i32
    return %c0_i32, %c0_i32_0 : i32, i32
  }
  func.func @transform_2(%arg0: i32) -> (i32, i32) {
    %c0_i32 = arith.constant 0 : i32
    %c0_i32_0 = arith.constant 0 : i32
    %c0_i32_1 = arith.constant 0 : i32
    return %c0_i32, %c0_i32_0 : i32, i32
  }
  func.func @transform_3(%arg0: i32) -> (i32, i32) {
    %c0_i32 = arith.constant 0 : i32
    %c0_i32_0 = arith.constant 0 : i32
    return %arg0, %c0_i32 : i32, i32
  }
}

</mosaic_0001>

<llo_original>
// kernel: tpu_custom_call.1
$region0: #{tpu_custom_call.1}
  #allocation0 [shape = 'u32[]', space=smem, size = 0x4, offset = 0x4, fixed_abs, tag = 'smem constant byte address 0x4 - core index']
  #allocation1 [shape = 'u32[72,128]{1,0:T(1,128)}', space=vmem, size = 0x9000, scoped, tag = 'internal scratch']
  %s0 = inlined_call_operand.vmem [shape: f32[8,64], index: 0, kind: input, shape index: {}]
  %s1 = inlined_call_operand.vmem [shape: f32[64,32], index: 1, kind: input, shape index: {}]
  %s2 = inlined_call_operand.vmem [shape: f32[1,32], index: 2, kind: input, shape index: {}]
  %s3 = inlined_call_operand.hbm [shape: f32[8,32], index: 3, kind: output, shape index: {}]
  %s4 = sld [smem:[#allocation0]]
  $region22: #{tpu_custom_call.1} parent=0
    _
  %s6 = ssub.s32 1, %s4
  %s7 = scalar_select 0, %s6, %s4
  $region1: #{tpu_custom_call.1} parent=0
    #allocation2 [shape = 'u8[4096]{0}', space=vmem, size = 0x1000, scoped, tag = 'output window, operand 0, single buffered']
    #allocation3 [shape = 's32[1]{0}', space=sflag, size = 0x4, scoped, tag = 'scoped memory for tpu_custom_call.1']
    %8 = vsyncpa [#allocation3], 0
    // Predicated region
    $region2: #{tpu_custom_call.1} parent=1 // pred_check
      _
    $region3: #{tpu_custom_call.1} parent=1 // pred_check_branch
      %10 = sbr.rel (0) target = $region5
    $region4: #{tpu_custom_call.1} parent=1 // pred_region
      _
    $region5: #{tpu_custom_call.1} parent=1 // pred_fallthru
      _
    // Predicated region
    $region6: #{tpu_custom_call.1} parent=1 // pred_check
      _
    $region7: #{tpu_custom_call.1} parent=1 // pred_check_branch
      %12 = sbr.rel (0) target = $region9
    $region8: #{tpu_custom_call.1} parent=1 // pred_region
      _
    $region9: #{tpu_custom_call.1} parent=1 // pred_fallthru
      _
    // Predicated region
    $region10: #{tpu_custom_call.1} parent=1 // pred_check
      _
    $region11: #{tpu_custom_call.1} parent=1 // pred_check_branch
      %14 = sbr.rel (0) target = $region13
    $region12: #{tpu_custom_call.1} parent=1 // pred_region
      _
    $region13: #{tpu_custom_call.1} parent=1 // pred_fallthru
      _
    %v15 = vld [vmem:[%s0] sm:$0xff]
    %v16 = vld [vmem:[%s1] sm:$0xff]
    %v17 = vld [vmem:[%s1 + $0x8] sm:$0xff]
    %v18 = vld [vmem:[%s1 + $0x10] sm:$0xff]
    %v19 = vld [vmem:[%s1 + $0x18] sm:$0xff]
    %v20 = vld [vmem:[%s1 + $0x20] sm:$0xff]
    %v21 = vld [vmem:[%s1 + $0x28] sm:$0xff]
    %v22 = vld [vmem:[%s1 + $0x30] sm:$0xff]
    %v23 = vld [vmem:[%s1 + $0x38] sm:$0xff]
    %v24 = vld [vmem:[%s2] sm:$0x1]
    %v26 = vperm.slane %v24, 0
    %vm28 = vcmask 523264
    %v30 = vsel %vm28, %v15, 0
    %32 = vmatpush.msra.mxu0 0.0
    %33 = vmatpush.msra.mxu0 0.0
    %34 = vmatpush.msra.mxu0 0.0
    %35 = vmatpush.msra.mxu0 0.0
    %36 = vmatpush.msra.mxu0 0.0
    %37 = vmatpush.msra.mxu0 0.0
    %38 = vmatpush.msra.mxu0 0.0
    %39 = vmatpush.msra.mxu0 0.0
    %40 = vmatpush.msra.mxu0 %v23
    %41 = vmatpush.msra.mxu0 %v22
    %42 = vmatpush.msra.mxu0 %v21
    %43 = vmatpush.msra.mxu0 %v20
    %44 = vmatpush.msra.mxu0 %v19
    %45 = vmatpush.msra.mxu0 %v18
    %46 = vmatpush.msra.mxu0 %v17
    %47 = vmatpush.msra.mxu0 %v16
    %48 = vmatmul.f32.gmra.mxu0 %v30
    %v49 = vpop.f32.mrf.mxu0
    %v50 = vadd.f32 %v26, %v49
    %51 = vdwg.mxu0
    %vm52 = vcmask 261120
    %53 = vst.msk [vmem:[#allocation2] sm:$0xff] %vm52, %v50
    // Predicated region
    $region14: #{tpu_custom_call.1} parent=1 // pred_check
      _
    $region15: #{tpu_custom_call.1} parent=1 // pred_check_branch
      %55 = sbr.rel (0) target = $region17
    $region16: #{tpu_custom_call.1} parent=1 // pred_region
      %57 = vsyncadd [#allocation3], 0
      %s59 = sshll.u32 [#allocation2], 4
      %s60 = int_to_ptr.vmem [resolvable:$true] %s59
      %s61 = sshll.u32 %s3, 4
      %s62 = int_to_ptr.hbm [resolvable:$true] %s61
      %64 = dma.vmem_to_hbm [thread:$0]  %s60, 128, %s62, [#allocation3]
    $region17: #{tpu_custom_call.1} parent=1 // pred_fallthru
      _
    // Predicated region
    $region18: #{tpu_custom_call.1} parent=1 // pred_check
      _
    $region19: #{tpu_custom_call.1} parent=1 // pred_check_branch
      %66 = sbr.rel (0) target = $region21
    $region20: #{tpu_custom_call.1} parent=1 // pred_region
      %68 = dma.done [#allocation3], 128
    $region21: #{tpu_custom_call.1} parent=1 // pred_fallthru
      _
    %69 = vsyncpa [#allocation3], 1

</llo_original>
